<compile_context>
chip_gen: v7x
topology: tpu7x:2x2x1
jax: 0.10.0
libtpu: 0.0.40
codegen_flags: <defaults>
</compile_context>

<pallas_src>
import functools

import jax
import jax.numpy as jnp
import numpy as np
from jax.experimental import pallas as pl
from jax.experimental.pallas import tpu as pltpu


# --------------------------- VMEM budget (per-generation) ---------------------------

@functools.lru_cache(maxsize=None)
def _vmem_limit_bytes():
    """Generation-aware scoped-VMEM limit; safe 32 MiB fallback if query fails."""
    try:
        info = pltpu.get_tpu_info()
        cap = getattr(info, "vmem_capacity_bytes", None)
        if cap:
            # Leave headroom for compiler scratch; ~48 MiB on v7x (64 MiB
            # physical), ~100 MiB on v5e/v6e (128 MiB physical).
            return int(max(32 * 1024 * 1024,
                           min(int(cap) - 16 * 1024 * 1024, 100 * 1024 * 1024)))
    except Exception:
        pass
    return 32 * 1024 * 1024


def _pick_tile(n, max_t, mult):
    """Largest divisor of n that is <= max_t, preferring multiples of `mult`."""
    if n <= max_t:
        return n
    for d in range(max_t, 0, -1):
        if n % d == 0 and d % mult == 0:
            return d
    for d in range(max_t, 0, -1):
        if n % d == 0:
            return d
    return n


# ----------------------- tiled linear (matmul + bias) -----------------------

def _linear_kernel(x_ref, w_ref, b_ref, o_ref, acc_ref):
    @pl.when(pl.program_id(1) == 0)
    def _():
        acc_ref[...] = jnp.zeros_like(acc_ref)

    acc_ref[...] += jnp.dot(x_ref[...], w_ref[...],
                            preferred_element_type=jnp.float32)

    @pl.when(pl.program_id(1) == pl.num_programs(1) - 1)
    def _():
        o_ref[...] = (acc_ref[...] + b_ref[...]).astype(o_ref.dtype)


def pallas_linear(x2d, w, b, *, out_dtype=jnp.float32, tm_max=1024, tk_max=1024):
    """x2d: (M, K), w: (K, N), b: (N,) -> (M, N); row-tiled + K-accumulated (f32 acc)."""
    M, K = x2d.shape
    N = w.shape[1]
    tm = _pick_tile(M, tm_max, 8)
    tk = _pick_tile(K, tk_max, 128)
    grid = (M // tm, K // tk)
    return pl.pallas_call(
        _linear_kernel,
        out_shape=jax.ShapeDtypeStruct((M, N), out_dtype),
        grid=grid,
        in_specs=[pl.BlockSpec((tm, tk), lambda i, k: (i, k)),
                  pl.BlockSpec((tk, N), lambda i, k: (k, 0)),
                  pl.BlockSpec((1, N), lambda i, k: (0, 0))],
        out_specs=pl.BlockSpec((tm, N), lambda i, k: (i, 0)),
        scratch_shapes=[pltpu.VMEM((tm, N), jnp.float32)],
        compiler_params=pltpu.CompilerParams(
            dimension_semantics=("parallel", "arbitrary"),
            vmem_limit_bytes=_vmem_limit_bytes()),
    )(x2d, w, b.reshape(1, N).astype(jnp.float32))


# ---------------- fused spatial-reduction linear + LayerNorm ----------------

def _linear_ln_kernel(x_ref, w_ref, b_ref, g_ref, bb_ref, o_ref, acc_ref, *, eps):
    @pl.when(pl.program_id(1) == 0)
    def _():
        acc_ref[...] = jnp.zeros_like(acc_ref)

    acc_ref[...] += jnp.dot(x_ref[...], w_ref[...],
                            preferred_element_type=jnp.float32)

    @pl.when(pl.program_id(1) == pl.num_programs(1) - 1)
    def _():
        y = acc_ref[...] + b_ref[...]                       # f32 (tm, C)
        mu = jnp.mean(y, axis=-1, keepdims=True)
        var = jnp.mean(jnp.square(y - mu), axis=-1, keepdims=True)
        o_ref[...] = ((y - mu) * jax.lax.rsqrt(var + eps) * g_ref[...]
                      + bb_ref[...]).astype(o_ref.dtype)


def pallas_linear_ln(x2d, w, b, gamma, beta, *, out_dtype=jnp.float32, eps=1e-5,
                     tm_max=1024, tk_max=1024):
    """(x2d @ w + b) followed by LayerNorm over the channel dim, one HBM pass."""
    M, K = x2d.shape
    N = w.shape[1]
    tm = _pick_tile(M, tm_max, 8)
    tk = _pick_tile(K, tk_max, 128)
    grid = (M // tm, K // tk)
    kern = functools.partial(_linear_ln_kernel, eps=eps)
    return pl.pallas_call(
        kern,
        out_shape=jax.ShapeDtypeStruct((M, N), out_dtype),
        grid=grid,
        in_specs=[pl.BlockSpec((tm, tk), lambda i, k: (i, k)),
                  pl.BlockSpec((tk, N), lambda i, k: (k, 0)),
                  pl.BlockSpec((1, N), lambda i, k: (0, 0)),
                  pl.BlockSpec((1, N), lambda i, k: (0, 0)),
                  pl.BlockSpec((1, N), lambda i, k: (0, 0))],
        out_specs=pl.BlockSpec((tm, N), lambda i, k: (i, 0)),
        scratch_shapes=[pltpu.VMEM((tm, N), jnp.float32)],
        compiler_params=pltpu.CompilerParams(
            dimension_semantics=("parallel", "arbitrary"),
            vmem_limit_bytes=_vmem_limit_bytes()),
    )(x2d, w, b.reshape(1, N).astype(jnp.float32),
      gamma.reshape(1, N).astype(jnp.float32),
      beta.reshape(1, N).astype(jnp.float32))


# ---------------------- flash attention (online softmax) ---------------------

def _flash_attn_kernel(q_ref, kt_ref, v_ref, o_ref,
                       q_scr, m_scr, l_scr, acc_scr, *, scale, head):
    tq = q_ref.shape[1]
    C = q_ref.shape[2]
    dh = C // head
    ki = pl.program_id(2)

    @pl.when(ki == 0)
    def _():
        # Pre-scale q once per q tile (loop-invariant across the kv axis).
        q_scr[...] = (q_ref[0] * scale).astype(q_scr.dtype)
        m_scr[...] = jnp.full_like(m_scr, -jnp.inf)
        l_scr[...] = jnp.zeros_like(l_scr)
        acc_scr[...] = jnp.zeros_like(acc_scr)

    q = q_scr[...]              # (tq, C)  bf16, pre-scaled
    kt = kt_ref[0]              # (C, tk)  bf16, K-major -> plain matmul, no transpose
    v = v_ref[0]                # (tk, C)  bf16

    alphas, pvs = [], []
    for h in range(head):       # static unroll over heads (dh-limited MXU; bandwidth-bound)
        sl = slice(h * dh, (h + 1) * dh)
        s = jnp.dot(q[:, sl], kt[sl, :],
                    preferred_element_type=jnp.float32)                  # (tq, tk) f32
        m_prev = m_scr[h]                                                # (tq, 1) f32
        m_new = jnp.maximum(m_prev, jnp.max(s, axis=-1, keepdims=True))
        alpha = jnp.exp(m_prev - m_new)                                  # f32 (v5e: no bf16 EUP)
        p = jnp.exp(s - m_new)                                           # f32
        l_scr[h] = alpha * l_scr[h] + jnp.sum(p, axis=-1, keepdims=True)
        m_scr[h] = m_new
        pvs.append(jnp.dot(p.astype(v.dtype), v[:, sl],
                           preferred_element_type=jnp.float32))          # (tq, dh) f32
        alphas.append(jnp.broadcast_to(alpha, (tq, dh)))

    # One lane-dense (tq, C) accumulator read-modify-write per kv step
    # (instead of `head` masked sub-vreg RMWs).
    acc_scr[...] = (jnp.concatenate(alphas, axis=-1) * acc_scr[...]
                    + jnp.concatenate(pvs, axis=-1))

    @pl.when(ki == pl.num_programs(2) - 1)
    def _():
        inv = jnp.concatenate(
            [jnp.broadcast_to(pl.reciprocal(l_scr[h], approx=True), (tq, dh))
             for h in range(head)], axis=-1)                             # EUP slot
        # Single lane-dense (tq, C) store == (attn @ v).transpose(1,2).reshape(B,N,C)
        o_ref[0] = (acc_scr[...] * inv).astype(o_ref.dtype)


def pallas_flash_attention(q, kt, v, scale, head, *, tq_max=512, tk_max=512):
    """q: (B, N, C), kt: (B, C, M) (K-major), v: (B, M, C); heads contiguous in channels.
    Returns (B, N, C) with heads already concatenated along channels."""
    B, N, C = q.shape
    M = v.shape[1]
    tq = _pick_tile(N, tq_max, 8)
    tk = _pick_tile(M, tk_max, 128)      # lane-aligned kv tile (>=128 preferred)
    grid = (B, N // tq, M // tk)         # kv (reduction) axis last, "arbitrary"
    kern = functools.partial(_flash_attn_kernel, scale=scale, head=head)
    return pl.pallas_call(
        kern,
        out_shape=jax.ShapeDtypeStruct((B, N, C), q.dtype),
        grid=grid,
        in_specs=[pl.BlockSpec((1, tq, C), lambda b, qi, ki: (b, qi, 0)),
                  pl.BlockSpec((1, C, tk), lambda b, qi, ki: (b, 0, ki)),
                  pl.BlockSpec((1, tk, C), lambda b, qi, ki: (b, ki, 0))],
        out_specs=pl.BlockSpec((1, tq, C), lambda b, qi, ki: (b, qi, 0)),
        scratch_shapes=[pltpu.VMEM((tq, C), q.dtype),            # pre-scaled q cache
                        pltpu.VMEM((head, tq, 1), jnp.float32),  # running max
                        pltpu.VMEM((head, tq, 1), jnp.float32),  # running sum
                        pltpu.VMEM((tq, C), jnp.float32)],       # output accumulator
        compiler_params=pltpu.CompilerParams(
            dimension_semantics=("parallel", "parallel", "arbitrary"),
            vmem_limit_bytes=_vmem_limit_bytes()),
    )(q, kt, v)


# ---------------------------- pure-JAX references ----------------------------

def _linear_ref(x2d, w, b, *, out_dtype=jnp.float32):
    y = x2d.astype(jnp.float32) @ w.astype(jnp.float32) + b.astype(jnp.float32)[None, :]
    return y.astype(out_dtype)


def _linear_ln_ref(x2d, w, b, gamma, beta, *, out_dtype=jnp.float32, eps=1e-5):
    y = x2d.astype(jnp.float32) @ w.astype(jnp.float32) + b.astype(jnp.float32)[None, :]
    mu = y.mean(-1, keepdims=True)
    var = ((y - mu) ** 2).mean(-1, keepdims=True)
    y = ((y - mu) * jax.lax.rsqrt(var + eps) * gamma.astype(jnp.float32)[None, :]
         + beta.astype(jnp.float32)[None, :])
    return y.astype(out_dtype)


def _attention_ref(q, kt, v, scale, head):
    B, N, C = q.shape
    M = v.shape[1]
    dh = C // head
    qf = q.astype(jnp.float32).reshape(B, N, head, dh)
    kf = jnp.transpose(kt, (0, 2, 1)).astype(jnp.float32).reshape(B, M, head, dh)
    vf = v.astype(jnp.float32).reshape(B, M, head, dh)
    s = jnp.einsum('bnhd,bmhd->bhnm', qf, kf) * scale
    p = jax.nn.softmax(s, axis=-1)
    p = p.astype(v.dtype).astype(jnp.float32)   # mirror bf16 MXU operand rounding
    o = jnp.einsum('bhnm,bmhd->bnhd', p, vf)
    return o.reshape(B, N, C).astype(q.dtype)


# ------------------------------- model wrapper --------------------------------

def efficient_self_atten(x, p, *, head, reduction_ratio, H, W,
                         linear_fn, linear_ln_fn, attn_fn,
                         compute_dtype=jnp.bfloat16):
    B, N, C = x.shape
    dh = C // head
    scale = float(dh) ** (-0.5)

    xc = x.astype(compute_dtype)

    # q projection — stays token-major (B, N, C); heads contiguous in channels.
    q = linear_fn(xc.reshape(B * N, C), p['q_w'], p['q_b'],
                  out_dtype=compute_dtype).reshape(B, N, C)

    # Spatial reduction: Conv2d(dim, dim, r, r) stride r == patch matmul,
    # with LayerNorm fused into the matmul epilogue (one HBM pass).
    if reduction_ratio > 1:
        r = reduction_ratio
        Hp, Wp = H // r, W // r
        patches = xc.reshape(B, H, W, C).reshape(B, Hp, r, Wp, r, C)
        patches = patches.transpose(0, 1, 3, 2, 4, 5).reshape(B * Hp * Wp, r * r * C)
        w_flat = jnp.transpose(p['sr_w'], (2, 3, 1, 0)).reshape(r * r * C, C)
        xr2d = linear_ln_fn(patches, w_flat, p['sr_b'], p['ln_g'], p['ln_b'],
                            out_dtype=compute_dtype)
        Mr = Hp * Wp
    else:
        xr2d = xc.reshape(B * N, C)
        Mr = N

    # k/v projections: split kv weight columns so each lands in contiguous
    # (head, dh) channel order — no activation-side slicing or head transposes.
    k = linear_fn(xr2d, p['kv_w'][:, :C], p['kv_b'][:C],
                  out_dtype=compute_dtype).reshape(B, Mr, C)
    v = linear_fn(xr2d, p['kv_w'][:, C:], p['kv_b'][C:],
                  out_dtype=compute_dtype).reshape(B, Mr, C)
    # One cheap wrapper-side transpose (Mr is already reduced by r^2) so the
    # QK^T contraction inside the kernel needs no XLU transpose.
    kt = jnp.transpose(k, (0, 2, 1))                                  # (B, C, Mr)

    o = attn_fn(q, kt, v, scale, head)                                # (B, N, C)
    out = linear_fn(o.reshape(B * N, C), p['proj_w'], p['proj_b'],
                    out_dtype=jnp.float32)
    return out.reshape(B, N, C)


# ------------------------------- parameter init --------------------------------

def init_params(key, dim, reduction_ratio):
    ks = jax.random.split(key, 8)

    def w(k, shape, s=0.2):
        return (s * jax.random.normal(k, shape)).astype(jnp.float32)

    p = {
        'q_w': w(ks[0], (dim, dim)),        'q_b': w(ks[1], (dim,)),
        'kv_w': w(ks[2], (dim, 2 * dim)),   'kv_b': w(ks[3], (2 * dim,)),
        'proj_w': w(ks[4], (dim, dim)),     'proj_b': w(ks[5], (dim,)),
    }
    if reduction_ratio > 1:
        p['sr_w'] = w(ks[6], (dim, dim, reduction_ratio, reduction_ratio))
        p['sr_b'] = w(ks[7], (dim,))
        p['ln_g'] = jnp.ones((dim,), jnp.float32)
        p['ln_b'] = jnp.zeros((dim,), jnp.float32)
    return p


def cast_params(p, wdtype):
    """Weights -> bf16 (MXU operands); biases / LN affine stay f32."""
    return {k: (v.astype(wdtype) if k.endswith('_w') else v.astype(jnp.float32))
            for k, v in p.items()}


# ------------------------------------- main -------------------------------------

if __name__ == "__main__":
    dim, head, reduction_ratio = 32, 4, 4
    B, H, W = 2, 16, 16
    N = H * W

    key = jax.random.PRNGKey(0)
    kx, kp = jax.random.split(key)
    x = jax.random.normal(kx, (B, N, dim), dtype=jnp.float32)
    params = init_params(kp, dim, reduction_ratio)

    # bf16 MXU operands / activations, f32 accumulation + softmax state.
    # Both the Pallas path and the reference see the same bf16-rounded weights.
    cparams = cast_params(params, jnp.bfloat16)

    # Moderate tile maxima: exercise row-tiling / K-accumulation multi-step grids
    # on this toy problem while staying lane-aligned (tk multiples of 128).
    linear_fn = functools.partial(pallas_linear, tm_max=256, tk_max=256)
    linear_ln_fn = functools.partial(pallas_linear_ln, tm_max=256, tk_max=256)
    attn_fn = functools.partial(pallas_flash_attention, tq_max=128, tk_max=512)

    run = functools.partial(efficient_self_atten, head=head,
                            reduction_ratio=reduction_ratio, H=H, W=W,
                            compute_dtype=jnp.bfloat16)

    out = jax.block_until_ready(
        run(x, cparams, linear_fn=linear_fn, linear_ln_fn=linear_ln_fn,
            attn_fn=attn_fn))
    ref = jax.block_until_ready(
        run(x, cparams, linear_fn=_linear_ref, linear_ln_fn=_linear_ln_ref,
            attn_fn=_attention_ref))

    assert out.shape == (B, N, dim)
    out_np = np.asarray(out, dtype=np.float32)
    ref_np = np.asarray(ref, dtype=np.float32)
    assert np.all(np.isfinite(out_np))
    # Tolerance covers bf16 intermediate rounding + approx-reciprocal softmax norm.
    assert np.allclose(out_np, ref_np, rtol=3e-2, atol=3e-2), \
        "Pallas output mismatch vs pure-JAX reference"

    print("KERNEL_OK")
</pallas_src>

<mosaic_0001>
module attributes {stable_mosaic.version = 11 : i64} {
  func.func @_linear_kernel(%arg0: i32, %arg1: i32, %arg2: memref<256x32xbf16, #tpu.memory_space<vmem>>, %arg3: memref<32x32xbf16, #tpu.memory_space<vmem>>, %arg4: memref<1x32xf32, #tpu.memory_space<vmem>>, %arg5: memref<256x32xbf16, #tpu.memory_space<vmem>>, %arg6: memref<256x32xf32, #tpu.memory_space<vmem>>) attributes {dimension_semantics = [#tpu.dimension_semantics<parallel>, #tpu.dimension_semantics<arbitrary>], iteration_bounds = array<i64: 2, 1>, scalar_prefetch = 0 : i64, scratch_operands = 1 : i64, tpu.core_type = #tpu.core_type<tc>, window_params = [{transform_indices = @transform_0, window_bounds = array<i64: 256, 32>}, {transform_indices = @transform_1, window_bounds = array<i64: 32, 32>}, {pipeline_mode = #tpu.pipeline_mode<synchronous>, transform_indices = @transform_2, window_bounds = array<i64: 1, 32>}, {transform_indices = @transform_3, window_bounds = array<i64: 256, 32>}]} {
    %c0_i32 = arith.constant 0 : i32
    %0 = arith.cmpi eq, %arg1, %c0_i32 : i32
    %1 = arith.extui %0 : i1 to i32
    %c0_i32_0 = arith.constant 0 : i32
    %2 = arith.cmpi ne, %1, %c0_i32_0 : i32
    scf.if %2 {
      %cst_10 = arith.constant 0.000000e+00 : f32
      %12 = vector.broadcast %cst_10 : f32 to vector<256x32xf32>
      %c0_11 = arith.constant 0 : index
      %c0_12 = arith.constant 0 : index
      %13 = vector.load %arg6[%c0_11, %c0_12] : memref<256x32xf32, #tpu.memory_space<vmem>>, vector<256x32xf32>
      tpu.vector_store %arg6[%c0_11, %c0_12], %12 {strides = array<i32>} : memref<256x32xf32, #tpu.memory_space<vmem>>, vector<256x32xf32>,
    } else {
    }
    %c0 = arith.constant 0 : index
    %c0_1 = arith.constant 0 : index
    %3 = vector.load %arg6[%c0, %c0_1] : memref<256x32xf32, #tpu.memory_space<vmem>>, vector<256x32xf32>
    %c0_2 = arith.constant 0 : index
    %c0_3 = arith.constant 0 : index
    %4 = vector.load %arg2[%c0_2, %c0_3] : memref<256x32xbf16, #tpu.memory_space<vmem>>, vector<256x32xbf16>
    %c0_4 = arith.constant 0 : index
    %c0_5 = arith.constant 0 : index
    %5 = vector.load %arg3[%c0_4, %c0_5] : memref<32x32xbf16, #tpu.memory_space<vmem>>, vector<32x32xbf16>
    %cst = arith.constant dense<0.000000e+00> : vector<256x32xf32>
    %6 = tpu.matmul %4, %5, %cst {dimension_numbers = #tpu.dot_dimension_numbers<[1], [0], [0], [1], [0, 0, 1, 1], [], []>} : vector<256x32xbf16>, vector<32x32xbf16>, vector<256x32xf32> -> vector<256x32xf32>
    %7 = arith.addf %3, %6 : vector<256x32xf32>
    %c0_6 = arith.constant 0 : index
    %c0_7 = arith.constant 0 : index
    %8 = vector.load %arg6[%c0_6, %c0_7] : memref<256x32xf32, #tpu.memory_space<vmem>>, vector<256x32xf32>
    tpu.vector_store %arg6[%c0_6, %c0_7], %7 {strides = array<i32>} : memref<256x32xf32, #tpu.memory_space<vmem>>, vector<256x32xf32>,
    %c0_i32_8 = arith.constant 0 : i32
    %9 = arith.cmpi eq, %arg1, %c0_i32_8 : i32
    %10 = arith.extui %9 : i1 to i32
    %c0_i32_9 = arith.constant 0 : i32
    %11 = arith.cmpi ne, %10, %c0_i32_9 : i32
    scf.if %11 {
      %c0_10 = arith.constant 0 : index
      %c0_11 = arith.constant 0 : index
      %12 = vector.load %arg6[%c0_10, %c0_11] : memref<256x32xf32, #tpu.memory_space<vmem>>, vector<256x32xf32>
      %c0_12 = arith.constant 0 : index
      %c0_13 = arith.constant 0 : index
      %13 = vector.load %arg4[%c0_12, %c0_13] : memref<1x32xf32, #tpu.memory_space<vmem>>, vector<1x32xf32>
      %14 = vector.broadcast %13 : vector<1x32xf32> to vector<256x32xf32>
      %15 = arith.addf %12, %14 : vector<256x32xf32>
      %16 = arith.truncf %15 : vector<256x32xf32> to vector<256x32xbf16>
      %c0_14 = arith.constant 0 : index
      %c0_15 = arith.constant 0 : index
      %17 = vector.load %arg5[%c0_14, %c0_15] : memref<256x32xbf16, #tpu.memory_space<vmem>>, vector<256x32xbf16>
      tpu.vector_store %arg5[%c0_14, %c0_15], %16 {strides = array<i32>} : memref<256x32xbf16, #tpu.memory_space<vmem>>, vector<256x32xbf16>,
    } else {
    }
    return
  }
  func.func @transform_0(%arg0: i32, %arg1: i32) -> (i32, i32) {
    %c0_i32 = arith.constant 0 : i32
    return %arg0, %arg1 : i32, i32
  }
  func.func @transform_1(%arg0: i32, %arg1: i32) -> (i32, i32) {
    %c0_i32 = arith.constant 0 : i32
    %c0_i32_0 = arith.constant 0 : i32
    return %arg1, %c0_i32 : i32, i32
  }
  func.func @transform_2(%arg0: i32, %arg1: i32) -> (i32, i32) {
    %c0_i32 = arith.constant 0 : i32
    %c0_i32_0 = arith.constant 0 : i32
    %c0_i32_1 = arith.constant 0 : i32
    return %c0_i32, %c0_i32_0 : i32, i32
  }
  func.func @transform_3(%arg0: i32, %arg1: i32) -> (i32, i32) {
    %c0_i32 = arith.constant 0 : i32
    %c0_i32_0 = arith.constant 0 : i32
    return %arg0, %c0_i32 : i32, i32
  }
}

</mosaic_0001>

<llo_original>
// kernel: tpu_custom_call.1
$region0: #{tpu_custom_call.1}
  #allocation0 [shape = 'u32[]', space=smem, size = 0x4, offset = 0x4, fixed_abs, tag = 'smem constant byte address 0x4 - core index']
  #allocation1 [shape = 'u32[144,128]{1,0:T(1,128)}', space=vmem, size = 0x12000, scoped, tag = 'internal scratch']
  #allocation2 [shape = 'f32[256,32]{1,0:T(8,128)}', space=vmem, size = 0x20000, scoped, tag = 'scratch operand']
  %s0 = inlined_call_operand.vmem [shape: bf16[512,32], index: 0, kind: input, shape index: {}]
  %s1 = inlined_call_operand.vmem [shape: bf16[32,32], index: 1, kind: input, shape index: {}]
  %s2 = inlined_call_operand.vmem [shape: f32[1,32], index: 2, kind: input, shape index: {}]
  %s3 = inlined_call_operand.vmem [shape: bf16[512,32], index: 3, kind: output, shape index: {}]
  %s4 = sld [smem:[#allocation0]]
  $region53: #{tpu_custom_call.1} parent=0
    _
  %s6 = ssub.s32 1, %s4
  %s7 = scalar_select 0, %s6, %s4
  loop: start=0, step=1, limit=4
  $region2: #{tpu_custom_call.1} parent=0 // loop_pre_header
    _
  $region3: #{tpu_custom_call.1} parent=0 // loop_header
    %s9 = sphi 0, %s13
    %p10 = scmp.ge.s32.totalorder %s9, 4
    %s16 = sphi 0, %s28
    %s17 = sphi 0, %s24
    %s18 = sphi 0, %s16
    %s19 = sphi 0, %s17
    %s20 = sphi 0, %s18
    %s21 = sphi 0, %s19
    %s33 = sphi 0, %s35
    %s36 = sphi 0, %s33
    %s37 = sphi 0, %s36
    %s53 = sphi 0, %s37
    %s59 = sphi 0, %s61
    %s62 = sphi 0, %s59
    %s63 = sphi 0, %s62
    %s79 = sphi 0, %s63
    %s83 = sphi 0, %s83
    %s85 = sphi 0, %s83
    %s86 = sphi 0, %s85
    %s100 = sphi 0, %s86
    %s106 = sphi 0, %s108
    %s109 = sphi 0, %s106
    %s110 = sphi 0, %s109
    %s126 = sphi 0, %s110
  $region4: #{tpu_custom_call.1} parent=0 // loop_header_branch
    %12 = sbr.rel (%p10) target = $region8
  $region5: #{tpu_custom_call.1} parent=0 // loop_body
    %s14 = ssub.s32 %s9, 1
    %s15 = ssub.s32 %s9, 2
    %s22 = sadd.s32 1, %s17
    %p23 = scmp.ge.s32.totalorder %s22, 1
    %s24 = scalar_select %p23, 0, %s22
    %s25 = sadd.s32 1, %s16
    %s26 = scalar_select %p23, %s25, %s16
    %p27 = scmp.ge.s32.totalorder %s26, 2
    %s28 = scalar_select %p27, 0, %s26
    %s29 = ssub.s32 %s16, %s28
    %s30 = ssub.s32 %s17, %s24
    %s31 = sor.u32 %s29, %s30
    %p32 = scmp.eq.s32.totalorder %s31, 0
    %s34 = sadd.s32 %s33, 1
    %s35 = scalar_select %p32, %s33, %s34
    %p38 = pneg %p32
    %p39 = scmp.eq.s32.totalorder %s9, 1
    %p40 = por %p38, %p39
    %p41 = scmp.ne.s32.totalorder %s33, %s36
    %p42 = scmp.eq.s32.totalorder %s9, 0
    %p43 = por %p41, %p42
    %p44 = scmp.ne.s32.totalorder %s33, %s36
    %p45 = scmp.eq.s32.totalorder %s14, 1
    %p46 = por %p44, %p45
    %p47 = scmp.ne.s32.totalorder %s36, %s37
    %p48 = scmp.eq.s32.totalorder %s14, 0
    %p49 = por %p47, %p48
    %p50 = scmp.ne.s32.totalorder %s36, %s37
    %p51 = scmp.eq.s32.totalorder %s15, 1
    %p52 = por %p50, %p51
    %p54 = scmp.ne.s32.totalorder %s37, %s53
    %p55 = scmp.eq.s32.totalorder %s15, 0
    %p56 = por %p54, %p55
    %s57 = ssub.s32 %s17, %s24
    %p58 = scmp.eq.s32.totalorder %s57, 0
    %s60 = sadd.s32 %s59, 1
    %s61 = scalar_select %p58, %s59, %s60
    %p64 = pneg %p58
    %p65 = scmp.eq.s32.totalorder %s9, 1
    %p66 = por %p64, %p65
    %p67 = scmp.ne.s32.totalorder %s59, %s62
    %p68 = scmp.eq.s32.totalorder %s9, 0
    %p69 = por %p67, %p68
    %p70 = scmp.ne.s32.totalorder %s59, %s62
    %p71 = scmp.eq.s32.totalorder %s14, 1
    %p72 = por %p70, %p71
    %p73 = scmp.ne.s32.totalorder %s62, %s63
    %p74 = scmp.eq.s32.totalorder %s14, 0
    %p75 = por %p73, %p74
    %p76 = scmp.ne.s32.totalorder %s62, %s63
    %p77 = scmp.eq.s32.totalorder %s15, 1
    %p78 = por %p76, %p77
    %p80 = scmp.ne.s32.totalorder %s63, %s79
    %p81 = scmp.eq.s32.totalorder %s15, 0
    %p82 = por %p80, %p81
    %s84 = sadd.s32 %s83, 1
    %p87 = scmp.eq.s32.totalorder %s9, 1
    %p88 = scmp.ne.s32.totalorder %s83, %s85
    %p89 = scmp.eq.s32.totalorder %s9, 0
    %p90 = por %p88, %p89
    %p91 = scmp.ne.s32.totalorder %s83, %s85
    %p92 = scmp.eq.s32.totalorder %s14, 1
    %p93 = por %p91, %p92
    %p94 = scmp.ne.s32.totalorder %s85, %s86
    %p95 = scmp.eq.s32.totalorder %s14, 0
    %p96 = por %p94, %p95
    %p97 = scmp.ne.s32.totalorder %s85, %s86
    %p98 = scmp.eq.s32.totalorder %s15, 1
    %p99 = por %p97, %p98
    %p101 = scmp.ne.s32.totalorder %s86, %s100
    %p102 = scmp.eq.s32.totalorder %s15, 0
    %p103 = por %p101, %p102
    %s104 = ssub.s32 %s16, %s28
    %p105 = scmp.eq.s32.totalorder %s104, 0
    %s107 = sadd.s32 %s106, 1
    %s108 = scalar_select %p105, %s106, %s107
    %p111 = pneg %p105
    %p112 = scmp.eq.s32.totalorder %s9, 1
    %p113 = por %p111, %p112
    %p114 = scmp.ne.s32.totalorder %s106, %s109
    %p115 = scmp.eq.s32.totalorder %s9, 0
    %p116 = por %p114, %p115
    %p117 = scmp.ne.s32.totalorder %s106, %s109
    %p118 = scmp.eq.s32.totalorder %s14, 1
    %p119 = por %p117, %p118
    %p120 = scmp.ne.s32.totalorder %s109, %s110
    %p121 = scmp.eq.s32.totalorder %s14, 0
    %p122 = por %p120, %p121
    %p123 = scmp.ne.s32.totalorder %s109, %s110
    %p124 = scmp.eq.s32.totalorder %s15, 1
    %p125 = por %p123, %p124
    %p127 = scmp.ne.s32.totalorder %s110, %s126
    %p128 = scmp.eq.s32.totalorder %s15, 0
    %p129 = por %p127, %p128
    %p130 = scmp.le.s32.totalorder 1, %s9
    %p131 = scmp.lt.s32.totalorder %s9, 3
    %p132 = pnand %p130, %p131
    %p133 = pneg %p132
    // Predicated region
    $region9: #{tpu_custom_call.1} parent=5 // pred_check
      _
    $region10: #{tpu_custom_call.1} parent=5 // pred_check_branch
      %135 = sbr.rel (%p132) target = $region12
    $region11: #{tpu_custom_call.1} parent=5 // pred_region
      %s136 = ssub.s32 %s9, 1
      // Predicated region
      $region13: #{tpu_custom_call.1} parent=11 // pred_check
        %p137 = pneg %p75
      $region14: #{tpu_custom_call.1} parent=11 // pred_check_branch
        %139 = sbr.rel (%p137) target = $region16
      $region15: #{tpu_custom_call.1} parent=11 // pred_region
        %s140 = smul.u32 4, %s19
        %p141 = scmp.lt.s32.totalorder %s140, 3
        %s142 = scalar_select %p141, %s140, 3
        %s143 = smul.addr %s142, 4
        %s144 = scalar_lea.vmem %s1, %s143
        %s145 = smul.u32 4, %s19
      $region16: #{tpu_custom_call.1} parent=11 // pred_fallthru
        _
      // Predicated region
      $region17: #{tpu_custom_call.1} parent=11 // pred_check
        %p146 = pneg %p96
      $region18: #{tpu_custom_call.1} parent=11 // pred_check_branch
        %148 = sbr.rel (%p146) target = $region20
      $region19: #{tpu_custom_call.1} parent=11 // pred_region
        _
      $region20: #{tpu_custom_call.1} parent=11 // pred_fallthru
        _
    $region12: #{tpu_custom_call.1} parent=5 // pred_fallthru
      _
    %p149 = scmp.lt.s32.totalorder %s9, 2
    // Predicated region
    $region21: #{tpu_custom_call.1} parent=5 // pred_check
      %p150 = pneg %p149
    $region22: #{tpu_custom_call.1} parent=5 // pred_check_branch
      %152 = sbr.rel (%p150) target = $region24
    $region23: #{tpu_custom_call.1} parent=5 // pred_region
      // Predicated region
      $region25: #{tpu_custom_call.1} parent=23 // pred_check
        %p153 = pneg %p43
      $region26: #{tpu_custom_call.1} parent=23 // pred_check_branch
        %155 = sbr.rel (%p153) target = $region28
      $region27: #{tpu_custom_call.1} parent=23 // pred_region
        %s156 = smul.u32 32, %s16
        %p157 = scmp.lt.s32.totalorder %s156, 63
        %s158 = scalar_select %p157, %s156, 63
        %p159 = scmp.lt.s32.totalorder %s17, 0
        %s160 = scalar_select %p159, %s17, 0
        %s161 = sadd.s32 %s160, %s158
        %s162 = smul.addr %s161, 4
        %s163 = scalar_lea.vmem %s0, %s162
        %s164 = smul.u32 32, %s16
      $region28: #{tpu_custom_call.1} parent=23 // pred_fallthru
        _
    $region24: #{tpu_custom_call.1} parent=5 // pred_fallthru
      _
    %p165 = scmp.le.s32.totalorder 1, %s9
    %p166 = scmp.lt.s32.totalorder %s9, 3
    %p167 = pnand %p165, %p166
    %p168 = pneg %p167
    // Predicated region
    $region29: #{tpu_custom_call.1} parent=5 // pred_check
      _
    $region30: #{tpu_custom_call.1} parent=5 // pred_check_branch
      %170 = sbr.rel (%p167) target = $region32
    $region31: #{tpu_custom_call.1} parent=5 // pred_region
      %s171 = ssub.s32 %s9, 1
      %s172 = smul.u32 32, %s18
      %p173 = scmp.lt.s32.totalorder %s172, 63
      %s174 = scalar_select %p173, %s172, 63
      %p175 = scmp.lt.s32.totalorder %s19, 0
      %s176 = scalar_select %p175, %s19, 0
      %s177 = sadd.s32 %s176, %s174
      %s178 = smul.addr %s177, 4
      %s179 = scalar_lea.vmem %s0, %s178
      %p180 = pneg %p49
      %p181 = pneg %p46
      %s182 = smul.u32 4, %s19
      %p183 = scmp.lt.s32.totalorder %s182, 3
      %s184 = scalar_select %p183, %s182, 3
      %s185 = smul.addr %s184, 4
      %s186 = scalar_lea.vmem %s1, %s185
      %p187 = pneg %p75
      %p188 = pneg %p72
      %p189 = pneg %p96
      %p190 = pneg %p93
      %p191 = pneg %p122
      %p192 = pneg %p119
      %s193 = smul.u32 32, %s18
      %p194 = scmp.lt.s32.totalorder %s193, 63
      %s195 = scalar_select %p194, %s193, 63
      %s196 = smul.addr %s195, 4
      %s197 = scalar_lea.vmem %s3, %s196
      %s198 = smul.u32 32, %s18
      %p199 = scmp.lt.s32.totalorder %s198, 63
      %s200 = scalar_select %p199, %s198, 63
      %p201 = scmp.lt.s32.totalorder %s19, 0
      %s202 = scalar_select %p201, %s19, 0
      %s203 = sadd.s32 %s202, %s200
      %s204 = smul.addr %s203, 4
      %s205 = scalar_lea.vmem %s0, %s204
      %s206 = smul.u32 32, %s18
      %s207 = smul.u32 4, %s19
      %p208 = scmp.lt.s32.totalorder %s207, 3
      %s209 = scalar_select %p208, %s207, 3
      %s210 = smul.addr %s209, 4
      %s211 = scalar_lea.vmem %s1, %s210
      %s212 = smul.u32 4, %s19
      %s213 = smul.u32 32, %s18
      %p214 = scmp.lt.s32.totalorder %s213, 63
      %s215 = scalar_select %p214, %s213, 63
      %s216 = smul.addr %s215, 4
      %s217 = scalar_lea.vmem %s3, %s216
      %s218 = smul.u32 32, %s18
      %p220 = scmp.eq.s32.totalorder %s19, 0
      // Predicated region
      $region33: #{tpu_custom_call.1} parent=31 // pred_check
        %p221 = pneg %p220
      $region34: #{tpu_custom_call.1} parent=31 // pred_check_branch
        %223 = sbr.rel (%p221) target = $region36
      $region35: #{tpu_custom_call.1} parent=31 // pred_region
        %vm224 = vcmask 261120
        %225 = vst.msk [vmem:[#allocation2] sm:$0xff] %vm224, 0.0
        %226 = vst.msk [vmem:[#allocation2 + $0x8] sm:$0xff] %vm224, 0.0
        %227 = vst.msk [vmem:[#allocation2 + $0x10] sm:$0xff] %vm224, 0.0
        %228 = vst.msk [vmem:[#allocation2 + $0x18] sm:$0xff] %vm224, 0.0
        %229 = vst.msk [vmem:[#allocation2 + $0x20] sm:$0xff] %vm224, 0.0
        %230 = vst.msk [vmem:[#allocation2 + $0x28] sm:$0xff] %vm224, 0.0
        %231 = vst.msk [vmem:[#allocation2 + $0x30] sm:$0xff] %vm224, 0.0
        %232 = vst.msk [vmem:[#allocation2 + $0x38] sm:$0xff] %vm224, 0.0
        %233 = vst.msk [vmem:[#allocation2 + $0x40] sm:$0xff] %vm224, 0.0
        %234 = vst.msk [vmem:[#allocation2 + $0x48] sm:$0xff] %vm224, 0.0
        %235 = vst.msk [vmem:[#allocation2 + $0x50] sm:$0xff] %vm224, 0.0
        %236 = vst.msk [vmem:[#allocation2 + $0x58] sm:$0xff] %vm224, 0.0
        %237 = vst.msk [vmem:[#allocation2 + $0x60] sm:$0xff] %vm224, 0.0
        %238 = vst.msk [vmem:[#allocation2 + $0x68] sm:$0xff] %vm224, 0.0
        %239 = vst.msk [vmem:[#allocation2 + $0x70] sm:$0xff] %vm224, 0.0
        %240 = vst.msk [vmem:[#allocation2 + $0x78] sm:$0xff] %vm224, 0.0
        %241 = vst.msk [vmem:[#allocation2 + $0x80] sm:$0xff] %vm224, 0.0
        %242 = vst.msk [vmem:[#allocation2 + $0x88] sm:$0xff] %vm224, 0.0
        %243 = vst.msk [vmem:[#allocation2 + $0x90] sm:$0xff] %vm224, 0.0
        %244 = vst.msk [vmem:[#allocation2 + $0x98] sm:$0xff] %vm224, 0.0
        %245 = vst.msk [vmem:[#allocation2 + $0xa0] sm:$0xff] %vm224, 0.0
        %246 = vst.msk [vmem:[#allocation2 + $0xa8] sm:$0xff] %vm224, 0.0
        %247 = vst.msk [vmem:[#allocation2 + $0xb0] sm:$0xff] %vm224, 0.0
        %248 = vst.msk [vmem:[#allocation2 + $0xb8] sm:$0xff] %vm224, 0.0
        %249 = vst.msk [vmem:[#allocation2 + $0xc0] sm:$0xff] %vm224, 0.0
        %250 = vst.msk [vmem:[#allocation2 + $0xc8] sm:$0xff] %vm224, 0.0
        %251 = vst.msk [vmem:[#allocation2 + $0xd0] sm:$0xff] %vm224, 0.0
        %252 = vst.msk [vmem:[#allocation2 + $0xd8] sm:$0xff] %vm224, 0.0
        %253 = vst.msk [vmem:[#allocation2 + $0xe0] sm:$0xff] %vm224, 0.0
        %254 = vst.msk [vmem:[#allocation2 + $0xe8] sm:$0xff] %vm224, 0.0
        %255 = vst.msk [vmem:[#allocation2 + $0xf0] sm:$0xff] %vm224, 0.0
        %256 = vst.msk [vmem:[#allocation2 + $0xf8] sm:$0xff] %vm224, 0.0
      $region36: #{tpu_custom_call.1} parent=31 // pred_fallthru
        _
      %v257 = vld [vmem:[#allocation2] sm:$0xff]
      %v258 = vld [vmem:[#allocation2 + $0x8] sm:$0xff]
      %v259 = vld [vmem:[#allocation2 + $0x10] sm:$0xff]
      %v260 = vld [vmem:[#allocation2 + $0x18] sm:$0xff]
      %v261 = vld [vmem:[#allocation2 + $0x20] sm:$0xff]
      %v262 = vld [vmem:[#allocation2 + $0x28] sm:$0xff]
      %v263 = vld [vmem:[#allocation2 + $0x30] sm:$0xff]
      %v264 = vld [vmem:[#allocation2 + $0x38] sm:$0xff]
      %v265 = vld [vmem:[#allocation2 + $0x40] sm:$0xff]
      %v266 = vld [vmem:[#allocation2 + $0x48] sm:$0xff]
      %v267 = vld [vmem:[#allocation2 + $0x50] sm:$0xff]
      %v268 = vld [vmem:[#allocation2 + $0x58] sm:$0xff]
      %v269 = vld [vmem:[#allocation2 + $0x60] sm:$0xff]
      %v270 = vld [vmem:[#allocation2 + $0x68] sm:$0xff]
      %v271 = vld [vmem:[#allocation2 + $0x70] sm:$0xff]
      %v272 = vld [vmem:[#allocation2 + $0x78] sm:$0xff]
      %v273 = vld [vmem:[#allocation2 + $0x80] sm:$0xff]
      %v274 = vld [vmem:[#allocation2 + $0x88] sm:$0xff]
      %v275 = vld [vmem:[#allocation2 + $0x90] sm:$0xff]
      %v276 = vld [vmem:[#allocation2 + $0x98] sm:$0xff]
      %v277 = vld [vmem:[#allocation2 + $0xa0] sm:$0xff]
      %v278 = vld [vmem:[#allocation2 + $0xa8] sm:$0xff]
      %v279 = vld [vmem:[#allocation2 + $0xb0] sm:$0xff]
      %v280 = vld [vmem:[#allocation2 + $0xb8] sm:$0xff]
      %v281 = vld [vmem:[#allocation2 + $0xc0] sm:$0xff]
      %v282 = vld [vmem:[#allocation2 + $0xc8] sm:$0xff]
      %v283 = vld [vmem:[#allocation2 + $0xd0] sm:$0xff]
      %v284 = vld [vmem:[#allocation2 + $0xd8] sm:$0xff]
      %v285 = vld [vmem:[#allocation2 + $0xe0] sm:$0xff]
      %v286 = vld [vmem:[#allocation2 + $0xe8] sm:$0xff]
      %v287 = vld [vmem:[#allocation2 + $0xf0] sm:$0xff]
      %v288 = vld [vmem:[#allocation2 + $0xf8] sm:$0xff]
      %v289 = vld [vmem:[%s205] sm:$0xf]
      %v290 = vld [vmem:[%s205 + $0x4] sm:$0xf]
      %v291 = vld [vmem:[%s205 + $0x8] sm:$0xf]
      %v292 = vld [vmem:[%s205 + $0xc] sm:$0xf]
      %v293 = vld [vmem:[%s205 + $0x10] sm:$0xf]
      %v294 = vld [vmem:[%s205 + $0x14] sm:$0xf]
      %v295 = vld [vmem:[%s205 + $0x18] sm:$0xf]
      %v296 = vld [vmem:[%s205 + $0x1c] sm:$0xf]
      %v297 = vld [vmem:[%s205 + $0x20] sm:$0xf]
      %v298 = vld [vmem:[%s205 + $0x24] sm:$0xf]
      %v299 = vld [vmem:[%s205 + $0x28] sm:$0xf]
      %v300 = vld [vmem:[%s205 + $0x2c] sm:$0xf]
      %v301 = vld [vmem:[%s205 + $0x30] sm:$0xf]
      %v302 = vld [vmem:[%s205 + $0x34] sm:$0xf]
      %v303 = vld [vmem:[%s205 + $0x38] sm:$0xf]
      %v304 = vld [vmem:[%s205 + $0x3c] sm:$0xf]
      %v305 = vld [vmem:[%s205 + $0x40] sm:$0xf]
      %v306 = vld [vmem:[%s205 + $0x44] sm:$0xf]
      %v307 = vld [vmem:[%s205 + $0x48] sm:$0xf]
      %v308 = vld [vmem:[%s205 + $0x4c] sm:$0xf]
      %v309 = vld [vmem:[%s205 + $0x50] sm:$0xf]
      %v310 = vld [vmem:[%s205 + $0x54] sm:$0xf]
      %v311 = vld [vmem:[%s205 + $0x58] sm:$0xf]
      %v312 = vld [vmem:[%s205 + $0x5c] sm:$0xf]
      %v313 = vld [vmem:[%s205 + $0x60] sm:$0xf]
      %v314 = vld [vmem:[%s205 + $0x64] sm:$0xf]
      %v315 = vld [vmem:[%s205 + $0x68] sm:$0xf]
      %v316 = vld [vmem:[%s205 + $0x6c] sm:$0xf]
      %v317 = vld [vmem:[%s205 + $0x70] sm:$0xf]
      %v318 = vld [vmem:[%s205 + $0x74] sm:$0xf]
      %v319 = vld [vmem:[%s205 + $0x78] sm:$0xf]
      %v320 = vld [vmem:[%s205 + $0x7c] sm:$0xf]
      %v321 = vld [vmem:[%s211] sm:$0xf]
      %v322 = vld [vmem:[%s211 + $0x4] sm:$0xf]
      %v323 = vld [vmem:[%s211 + $0x8] sm:$0xf]
      %v324 = vld [vmem:[%s211 + $0xc] sm:$0xf]
      %v357 = vunpack.c.l.b16 %v289
      %v358 = vunpack.c.l.b16 %v290
      %v359 = vunpack.c.l.b16 %v291
      %v360 = vunpack.c.l.b16 %v292
      %v361 = vunpack.c.l.b16 %v293
      %v362 = vunpack.c.l.b16 %v294
      %v363 = vunpack.c.l.b16 %v295
      %v364 = vunpack.c.l.b16 %v296
      %v365 = vunpack.c.l.b16 %v297
      %v366 = vunpack.c.l.b16 %v298
      %v367 = vunpack.c.l.b16 %v299
      %v368 = vunpack.c.l.b16 %v300
      %v369 = vunpack.c.l.b16 %v301
      %v370 = vunpack.c.l.b16 %v302
      %v371 = vunpack.c.l.b16 %v303
      %v372 = vunpack.c.l.b16 %v304
      %v373 = vunpack.c.l.b16 %v305
      %v374 = vunpack.c.l.b16 %v306
      %v375 = vunpack.c.l.b16 %v307
      %v376 = vunpack.c.l.b16 %v308
      %v377 = vunpack.c.l.b16 %v309
      %v378 = vunpack.c.l.b16 %v310
      %v379 = vunpack.c.l.b16 %v311
      %v380 = vunpack.c.l.b16 %v312
      %v381 = vunpack.c.l.b16 %v313
      %v382 = vunpack.c.l.b16 %v314
      %v383 = vunpack.c.l.b16 %v315
      %v384 = vunpack.c.l.b16 %v316
      %v385 = vunpack.c.l.b16 %v317
      %v386 = vunpack.c.l.b16 %v318
      %v387 = vunpack.c.l.b16 %v319
      %v388 = vunpack.c.l.b16 %v320
      %v389 = vpack.c.b16 %v358, %v357
      %v390 = vpack.c.b16 %v360, %v359
      %v391 = vpack.c.b16 %v362, %v361
      %v392 = vpack.c.b16 %v364, %v363
      %v393 = vpack.c.b16 %v366, %v365
      %v394 = vpack.c.b16 %v368, %v367
      %v395 = vpack.c.b16 %v370, %v369
      %v396 = vpack.c.b16 %v372, %v371
      %v397 = vpack.c.b16 %v374, %v373
      %v398 = vpack.c.b16 %v376, %v375
      %v399 = vpack.c.b16 %v378, %v377
      %v400 = vpack.c.b16 %v380, %v379
      %v401 = vpack.c.b16 %v382, %v381
      %v402 = vpack.c.b16 %v384, %v383
      %v403 = vpack.c.b16 %v386, %v385
      %v404 = vpack.c.b16 %v388, %v387
      %v409 = vunpack.c.l.b16 %v321
      %v410 = vunpack.c.l.b16 %v322
      %v411 = vunpack.c.l.b16 %v323
      %v412 = vunpack.c.l.b16 %v324
      %v413 = vpack.c.b16 %v410, %v409
      %v414 = vpack.c.b16 %v412, %v411
      %vm417 = vcmask 261120
      %v419 = vsel %vm417, %v389, 0
      %v422 = vsel %vm417, %v390, 0
      %v425 = vsel %vm417, %v391, 0
      %v428 = vsel %vm417, %v392, 0
      %v431 = vsel %vm417, %v393, 0
      %v434 = vsel %vm417, %v394, 0
      %v437 = vsel %vm417, %v395, 0
      %v440 = vsel %vm417, %v396, 0
      %v443 = vsel %vm417, %v397, 0
      %v446 = vsel %vm417, %v398, 0
      %v449 = vsel %vm417, %v399, 0
      %v452 = vsel %vm417, %v400, 0
      %v455 = vsel %vm417, %v401, 0
      %v458 = vsel %vm417, %v402, 0
      %v461 = vsel %vm417, %v403, 0
      %v464 = vsel %vm417, %v404, 0
      %466 = vmatprep.subr.bf16.mxu0 0
      %467 = vmatpush1.bf16.msra.mxu0 %v413
      %468 = vmatprep.subr.bf16.mxu0 0
      %469 = vmatpush1.bf16.msra.mxu0 %v414
      %470 = vmatprep.subr.bf16.mxu0 0
      %471 = vmatpush1.bf16.msra.mxu0 0
      %472 = vmatprep.subr.bf16.mxu0 0
      %473 = vmatpush1.bf16.msra.mxu0 0
      %474 = vmatprep.subr.bf16.mxu0 0
      %475 = vmatpush1.bf16.msra.mxu0 0
      %476 = vmatprep.subr.bf16.mxu0 0
      %477 = vmatpush1.bf16.msra.mxu0 0
      %478 = vmatprep.subr.bf16.mxu0 0
      %479 = vmatpush1.bf16.msra.mxu0 0
      %480 = vmatprep.subr.bf16.mxu0 0
      %481 = vmatpush1.bf16.msra.mxu0 0
      %482 = vmatprep.subr.bf16.mxu0 0
      %483 = vmatpush1.bf16.msra.mxu0 0
      %484 = vmatprep.subr.bf16.mxu0 0
      %485 = vmatpush1.bf16.msra.mxu0 0
      %486 = vmatprep.subr.bf16.mxu0 0
      %487 = vmatpush1.bf16.msra.mxu0 0
      %488 = vmatprep.subr.bf16.mxu0 0
      %489 = vmatpush1.bf16.msra.mxu0 0
      %490 = vmatprep.subr.bf16.mxu0 0
      %491 = vmatpush1.bf16.msra.mxu0 0
      %492 = vmatprep.subr.bf16.mxu0 0
      %493 = vmatpush1.bf16.msra.mxu0 0
      %494 = vmatprep.subr.bf16.mxu0 0
      %495 = vmatpush1.bf16.msra.mxu0 0
      %496 = vmatprep.subr.bf16.mxu0 0
      %497 = vmatpush1.bf16.msra.mxu0 0
      %498 = vmatprep.mubr.bf16.mxu0 0
      %499 = vmatmul.mubr.bf16.gmra.mrb[0].mxu0 %v419
      %v500 = vpop.f32.mrb[0].mxu0
      %v501 = vadd.f32 0.0, %v500
      %v502 = vpop.f32.mrb[0].mxu0
      %v503 = vpop.f32.mrb[0].mxu0
      %v504 = vadd.f32 0.0, %v503
      %v505 = vpop.f32.mrb[0].mxu0
      %506 = vmatprep.mubr.bf16.mxu0 0
      %507 = vmatmul.mubr.bf16.gmra.mrb[0].mxu0 %v422
      %v508 = vpop.f32.mrb[0].mxu0
      %v509 = vadd.f32 0.0, %v508
      %v510 = vpop.f32.mrb[0].mxu0
      %v511 = vpop.f32.mrb[0].mxu0
      %v512 = vadd.f32 0.0, %v511
      %v513 = vpop.f32.mrb[0].mxu0
      %514 = vmatprep.mubr.bf16.mxu0 0
      %515 = vmatmul.mubr.bf16.gmra.mrb[0].mxu0 %v425
      %v516 = vpop.f32.mrb[0].mxu0
      %v517 = vadd.f32 0.0, %v516
      %v518 = vpop.f32.mrb[0].mxu0
      %v519 = vpop.f32.mrb[0].mxu0
      %v520 = vadd.f32 0.0, %v519
      %v521 = vpop.f32.mrb[0].mxu0
      %522 = vmatprep.mubr.bf16.mxu0 0
      %523 = vmatmul.mubr.bf16.gmra.mrb[0].mxu0 %v428
      %v524 = vpop.f32.mrb[0].mxu0
      %v525 = vadd.f32 0.0, %v524
      %v526 = vpop.f32.mrb[0].mxu0
      %v527 = vpop.f32.mrb[0].mxu0
      %v528 = vadd.f32 0.0, %v527
      %v529 = vpop.f32.mrb[0].mxu0
      %530 = vmatprep.mubr.bf16.mxu0 0
      %531 = vmatmul.mubr.bf16.gmra.mrb[0].mxu0 %v431
      %v532 = vpop.f32.mrb[0].mxu0
      %v533 = vadd.f32 0.0, %v532
      %v534 = vpop.f32.mrb[0].mxu0
      %v535 = vpop.f32.mrb[0].mxu0
      %v536 = vadd.f32 0.0, %v535
      %v537 = vpop.f32.mrb[0].mxu0
      %538 = vmatprep.mubr.bf16.mxu0 0
      %539 = vmatmul.mubr.bf16.gmra.mrb[0].mxu0 %v434
      %v540 = vpop.f32.mrb[0].mxu0
      %v541 = vadd.f32 0.0, %v540
      %v542 = vpop.f32.mrb[0].mxu0
      %v543 = vpop.f32.mrb[0].mxu0
      %v544 = vadd.f32 0.0, %v543
      %v545 = vpop.f32.mrb[0].mxu0
      %546 = vmatprep.mubr.bf16.mxu0 0
      %547 = vmatmul.mubr.bf16.gmra.mrb[0].mxu0 %v437
      %v548 = vpop.f32.mrb[0].mxu0
      %v549 = vadd.f32 0.0, %v548
      %v550 = vpop.f32.mrb[0].mxu0
      %v551 = vpop.f32.mrb[0].mxu0
      %v552 = vadd.f32 0.0, %v551
      %v553 = vpop.f32.mrb[0].mxu0
      %554 = vmatprep.mubr.bf16.mxu0 0
      %555 = vmatmul.mubr.bf16.gmra.mrb[0].mxu0 %v440
      %v556 = vpop.f32.mrb[0].mxu0
      %v557 = vadd.f32 0.0, %v556
      %v558 = vpop.f32.mrb[0].mxu0
      %v559 = vpop.f32.mrb[0].mxu0
      %v560 = vadd.f32 0.0, %v559
      %v561 = vpop.f32.mrb[0].mxu0
      %562 = vmatprep.mubr.bf16.mxu0 0
      %563 = vmatmul.mubr.bf16.gmra.mrb[0].mxu0 %v443
      %v564 = vpop.f32.mrb[0].mxu0
      %v565 = vadd.f32 0.0, %v564
      %v566 = vpop.f32.mrb[0].mxu0
      %v567 = vpop.f32.mrb[0].mxu0
      %v568 = vadd.f32 0.0, %v567
      %v569 = vpop.f32.mrb[0].mxu0
      %570 = vmatprep.mubr.bf16.mxu0 0
      %571 = vmatmul.mubr.bf16.gmra.mrb[0].mxu0 %v446
      %v572 = vpop.f32.mrb[0].mxu0
      %v573 = vadd.f32 0.0, %v572
      %v574 = vpop.f32.mrb[0].mxu0
      %v575 = vpop.f32.mrb[0].mxu0
      %v576 = vadd.f32 0.0, %v575
      %v577 = vpop.f32.mrb[0].mxu0
      %578 = vmatprep.mubr.bf16.mxu0 0
      %579 = vmatmul.mubr.bf16.gmra.mrb[0].mxu0 %v449
      %v580 = vpop.f32.mrb[0].mxu0
      %v581 = vadd.f32 0.0, %v580
      %v582 = vpop.f32.mrb[0].mxu0
      %v583 = vpop.f32.mrb[0].mxu0
      %v584 = vadd.f32 0.0, %v583
      %v585 = vpop.f32.mrb[0].mxu0
      %586 = vmatprep.mubr.bf16.mxu0 0
      %587 = vmatmul.mubr.bf16.gmra.mrb[0].mxu0 %v452
      %v588 = vpop.f32.mrb[0].mxu0
      %v589 = vadd.f32 0.0, %v588
      %v590 = vpop.f32.mrb[0].mxu0
      %v591 = vpop.f32.mrb[0].mxu0
      %v592 = vadd.f32 0.0, %v591
      %v593 = vpop.f32.mrb[0].mxu0
      %594 = vmatprep.mubr.bf16.mxu0 0
      %595 = vmatmul.mubr.bf16.gmra.mrb[0].mxu0 %v455
      %v596 = vpop.f32.mrb[0].mxu0
      %v597 = vadd.f32 0.0, %v596
      %v598 = vpop.f32.mrb[0].mxu0
      %v599 = vpop.f32.mrb[0].mxu0
      %v600 = vadd.f32 0.0, %v599
      %v601 = vpop.f32.mrb[0].mxu0
      %602 = vmatprep.mubr.bf16.mxu0 0
      %603 = vmatmul.mubr.bf16.gmra.mrb[0].mxu0 %v458
      %v604 = vpop.f32.mrb[0].mxu0
      %v605 = vadd.f32 0.0, %v604
      %v606 = vpop.f32.mrb[0].mxu0
      %v607 = vpop.f32.mrb[0].mxu0
      %v608 = vadd.f32 0.0, %v607
      %v609 = vpop.f32.mrb[0].mxu0
      %610 = vmatprep.mubr.bf16.mxu0 0
      %611 = vmatmul.mubr.bf16.gmra.mrb[0].mxu0 %v461
      %v612 = vpop.f32.mrb[0].mxu0
      %v613 = vadd.f32 0.0, %v612
      %v614 = vpop.f32.mrb[0].mxu0
      %v615 = vpop.f32.mrb[0].mxu0
      %v616 = vadd.f32 0.0, %v615
      %v617 = vpop.f32.mrb[0].mxu0
      %618 = vmatprep.mubr.bf16.mxu0 0
      %619 = vmatmul.mubr.bf16.gmra.mrb[0].mxu0 %v464
      %v620 = vpop.f32.mrb[0].mxu0
      %v621 = vadd.f32 0.0, %v620
      %v622 = vpop.f32.mrb[0].mxu0
      %v623 = vpop.f32.mrb[0].mxu0
      %v624 = vadd.f32 0.0, %v623
      %v625 = vpop.f32.mrb[0].mxu0
      %626 = vdwg.mxu0
      %v627 = vadd.f32 %v257, %v501
      %v628 = vadd.f32 %v258, %v504
      %v629 = vadd.f32 %v259, %v509
      %v630 = vadd.f32 %v260, %v512
      %v631 = vadd.f32 %v261, %v517
      %v632 = vadd.f32 %v262, %v520
      %v633 = vadd.f32 %v263, %v525
      %v634 = vadd.f32 %v264, %v528
      %v635 = vadd.f32 %v265, %v533
      %v636 = vadd.f32 %v266, %v536
      %v637 = vadd.f32 %v267, %v541
      %v638 = vadd.f32 %v268, %v544
      %v639 = vadd.f32 %v269, %v549
      %v640 = vadd.f32 %v270, %v552
      %v641 = vadd.f32 %v271, %v557
      %v642 = vadd.f32 %v272, %v560
      %v643 = vadd.f32 %v273, %v565
      %v644 = vadd.f32 %v274, %v568
      %v645 = vadd.f32 %v275, %v573
      %v646 = vadd.f32 %v276, %v576
      %v647 = vadd.f32 %v277, %v581
      %v648 = vadd.f32 %v278, %v584
      %v649 = vadd.f32 %v279, %v589
      %v650 = vadd.f32 %v280, %v592
      %v651 = vadd.f32 %v281, %v597
      %v652 = vadd.f32 %v282, %v600
      %v653 = vadd.f32 %v283, %v605
      %v654 = vadd.f32 %v284, %v608
      %v655 = vadd.f32 %v285, %v613
      %v656 = vadd.f32 %v286, %v616
      %v657 = vadd.f32 %v287, %v621
      %v658 = vadd.f32 %v288, %v624
      %659 = vst.msk [vmem:[#allocation2] sm:$0xff] %vm417, %v627
      %660 = vst.msk [vmem:[#allocation2 + $0x8] sm:$0xff] %vm417, %v628
      %661 = vst.msk [vmem:[#allocation2 + $0x10] sm:$0xff] %vm417, %v629
      %662 = vst.msk [vmem:[#allocation2 + $0x18] sm:$0xff] %vm417, %v630
      %663 = vst.msk [vmem:[#allocation2 + $0x20] sm:$0xff] %vm417, %v631
      %664 = vst.msk [vmem:[#allocation2 + $0x28] sm:$0xff] %vm417, %v632
      %665 = vst.msk [vmem:[#allocation2 + $0x30] sm:$0xff] %vm417, %v633
      %666 = vst.msk [vmem:[#allocation2 + $0x38] sm:$0xff] %vm417, %v634
      %667 = vst.msk [vmem:[#allocation2 + $0x40] sm:$0xff] %vm417, %v635
      %668 = vst.msk [vmem:[#allocation2 + $0x48] sm:$0xff] %vm417, %v636
      %669 = vst.msk [vmem:[#allocation2 + $0x50] sm:$0xff] %vm417, %v637
      %670 = vst.msk [vmem:[#allocation2 + $0x58] sm:$0xff] %vm417, %v638
      %671 = vst.msk [vmem:[#allocation2 + $0x60] sm:$0xff] %vm417, %v639
      %672 = vst.msk [vmem:[#allocation2 + $0x68] sm:$0xff] %vm417, %v640
      %673 = vst.msk [vmem:[#allocation2 + $0x70] sm:$0xff] %vm417, %v641
      %674 = vst.msk [vmem:[#allocation2 + $0x78] sm:$0xff] %vm417, %v642
      %675 = vst.msk [vmem:[#allocation2 + $0x80] sm:$0xff] %vm417, %v643
      %676 = vst.msk [vmem:[#allocation2 + $0x88] sm:$0xff] %vm417, %v644
      %677 = vst.msk [vmem:[#allocation2 + $0x90] sm:$0xff] %vm417, %v645
      %678 = vst.msk [vmem:[#allocation2 + $0x98] sm:$0xff] %vm417, %v646
      %679 = vst.msk [vmem:[#allocation2 + $0xa0] sm:$0xff] %vm417, %v647
      %680 = vst.msk [vmem:[#allocation2 + $0xa8] sm:$0xff] %vm417, %v648
      %681 = vst.msk [vmem:[#allocation2 + $0xb0] sm:$0xff] %vm417, %v649
      %682 = vst.msk [vmem:[#allocation2 + $0xb8] sm:$0xff] %vm417, %v650
      %683 = vst.msk [vmem:[#allocation2 + $0xc0] sm:$0xff] %vm417, %v651
      %684 = vst.msk [vmem:[#allocation2 + $0xc8] sm:$0xff] %vm417, %v652
      %685 = vst.msk [vmem:[#allocation2 + $0xd0] sm:$0xff] %vm417, %v653
      %686 = vst.msk [vmem:[#allocation2 + $0xd8] sm:$0xff] %vm417, %v654
      %687 = vst.msk [vmem:[#allocation2 + $0xe0] sm:$0xff] %vm417, %v655
      %688 = vst.msk [vmem:[#allocation2 + $0xe8] sm:$0xff] %vm417, %v656
      %689 = vst.msk [vmem:[#allocation2 + $0xf0] sm:$0xff] %vm417, %v657
      %690 = vst.msk [vmem:[#allocation2 + $0xf8] sm:$0xff] %vm417, %v658
      // Predicated region
      $region37: #{tpu_custom_call.1} parent=31 // pred_check
        %p691 = pneg %p220
      $region38: #{tpu_custom_call.1} parent=31 // pred_check_branch
        %693 = sbr.rel (%p691) target = $region40
      $region39: #{tpu_custom_call.1} parent=31 // pred_region
        %v694 = vld [vmem:[#allocation2] sm:$0xff]
        %v695 = vld [vmem:[#allocation2 + $0x8] sm:$0xff]
        %v696 = vld [vmem:[#allocation2 + $0x10] sm:$0xff]
        %v697 = vld [vmem:[#allocation2 + $0x18] sm:$0xff]
        %v698 = vld [vmem:[#allocation2 + $0x20] sm:$0xff]
        %v699 = vld [vmem:[#allocation2 + $0x28] sm:$0xff]
        %v700 = vld [vmem:[#allocation2 + $0x30] sm:$0xff]
        %v701 = vld [vmem:[#allocation2 + $0x38] sm:$0xff]
        %v702 = vld [vmem:[#allocation2 + $0x40] sm:$0xff]
        %v703 = vld [vmem:[#allocation2 + $0x48] sm:$0xff]
        %v704 = vld [vmem:[#allocation2 + $0x50] sm:$0xff]
        %v705 = vld [vmem:[#allocation2 + $0x58] sm:$0xff]
        %v706 = vld [vmem:[#allocation2 + $0x60] sm:$0xff]
        %v707 = vld [vmem:[#allocation2 + $0x68] sm:$0xff]
        %v708 = vld [vmem:[#allocation2 + $0x70] sm:$0xff]
        %v709 = vld [vmem:[#allocation2 + $0x78] sm:$0xff]
        %v710 = vld [vmem:[#allocation2 + $0x80] sm:$0xff]
        %v711 = vld [vmem:[#allocation2 + $0x88] sm:$0xff]
        %v712 = vld [vmem:[#allocation2 + $0x90] sm:$0xff]
        %v713 = vld [vmem:[#allocation2 + $0x98] sm:$0xff]
        %v714 = vld [vmem:[#allocation2 + $0xa0] sm:$0xff]
        %v715 = vld [vmem:[#allocation2 + $0xa8] sm:$0xff]
        %v716 = vld [vmem:[#allocation2 + $0xb0] sm:$0xff]
        %v717 = vld [vmem:[#allocation2 + $0xb8] sm:$0xff]
        %v718 = vld [vmem:[#allocation2 + $0xc0] sm:$0xff]
        %v719 = vld [vmem:[#allocation2 + $0xc8] sm:$0xff]
        %v720 = vld [vmem:[#allocation2 + $0xd0] sm:$0xff]
        %v721 = vld [vmem:[#allocation2 + $0xd8] sm:$0xff]
        %v722 = vld [vmem:[#allocation2 + $0xe0] sm:$0xff]
        %v723 = vld [vmem:[#allocation2 + $0xe8] sm:$0xff]
        %v724 = vld [vmem:[#allocation2 + $0xf0] sm:$0xff]
        %v725 = vld [vmem:[#allocation2 + $0xf8] sm:$0xff]
        %v726 = vld [vmem:[%s2] sm:$0x1]
        %v728 = vlaneseq
        %v729 = vshrl.u32 %v728, 7
        %v730 = vsub.s32 0, %v729
        %v731 = vrot.slane %v726, %v730
        %v733 = vadd.f32 %v694, %v731
        %v734 = vadd.f32 %v695, %v731
        %v735 = vadd.f32 %v696, %v731
        %v736 = vadd.f32 %v697, %v731
        %v737 = vadd.f32 %v698, %v731
        %v738 = vadd.f32 %v699, %v731
        %v739 = vadd.f32 %v700, %v731
        %v740 = vadd.f32 %v701, %v731
        %v741 = vadd.f32 %v702, %v731
        %v742 = vadd.f32 %v703, %v731
        %v743 = vadd.f32 %v704, %v731
        %v744 = vadd.f32 %v705, %v731
        %v745 = vadd.f32 %v706, %v731
        %v746 = vadd.f32 %v707, %v731
        %v747 = vadd.f32 %v708, %v731
        %v748 = vadd.f32 %v709, %v731
        %v749 = vadd.f32 %v710, %v731
        %v750 = vadd.f32 %v711, %v731
        %v751 = vadd.f32 %v712, %v731
        %v752 = vadd.f32 %v713, %v731
        %v753 = vadd.f32 %v714, %v731
        %v754 = vadd.f32 %v715, %v731
        %v755 = vadd.f32 %v716, %v731
        %v756 = vadd.f32 %v717, %v731
        %v757 = vadd.f32 %v718, %v731
        %v758 = vadd.f32 %v719, %v731
        %v759 = vadd.f32 %v720, %v731
        %v760 = vadd.f32 %v721, %v731
        %v761 = vadd.f32 %v722, %v731
        %v762 = vadd.f32 %v723, %v731
        %v763 = vadd.f32 %v724, %v731
        %v764 = vadd.f32 %v725, %v731
        %v765 = vpack.c.bf16 %v734, %v733
        %v766 = vpack.c.bf16 %v736, %v735
        %v767 = vpack.c.bf16 %v738, %v737
        %v768 = vpack.c.bf16 %v740, %v739
        %v769 = vpack.c.bf16 %v742, %v741
        %v770 = vpack.c.bf16 %v744, %v743
        %v771 = vpack.c.bf16 %v746, %v745
        %v772 = vpack.c.bf16 %v748, %v747
        %v773 = vpack.c.bf16 %v750, %v749
        %v774 = vpack.c.bf16 %v752, %v751
        %v775 = vpack.c.bf16 %v754, %v753
        %v776 = vpack.c.bf16 %v756, %v755
        %v777 = vpack.c.bf16 %v758, %v757
        %v778 = vpack.c.bf16 %v760, %v759
        %v779 = vpack.c.bf16 %v762, %v761
        %v780 = vpack.c.bf16 %v764, %v763
        %v797 = vunpack.c.l.b16 %v765
        %v798 = vunpack.c.h.b16 %v765
        %v799 = vunpack.c.l.b16 %v766
        %v800 = vunpack.c.h.b16 %v766
        %v801 = vunpack.c.l.b16 %v767
        %v802 = vunpack.c.h.b16 %v767
        %v803 = vunpack.c.l.b16 %v768
        %v804 = vunpack.c.h.b16 %v768
        %v805 = vunpack.c.l.b16 %v769
        %v806 = vunpack.c.h.b16 %v769
        %v807 = vunpack.c.l.b16 %v770
        %v808 = vunpack.c.h.b16 %v770
        %v809 = vunpack.c.l.b16 %v771
        %v810 = vunpack.c.h.b16 %v771
        %v811 = vunpack.c.l.b16 %v772
        %v812 = vunpack.c.h.b16 %v772
        %v813 = vunpack.c.l.b16 %v773
        %v814 = vunpack.c.h.b16 %v773
        %v815 = vunpack.c.l.b16 %v774
        %v816 = vunpack.c.h.b16 %v774
        %v817 = vunpack.c.l.b16 %v775
        %v818 = vunpack.c.h.b16 %v775
        %v819 = vunpack.c.l.b16 %v776
        %v820 = vunpack.c.h.b16 %v776
        %v821 = vunpack.c.l.b16 %v777
        %v822 = vunpack.c.h.b16 %v777
        %v823 = vunpack.c.l.b16 %v778
        %v824 = vunpack.c.h.b16 %v778
        %v825 = vunpack.c.l.b16 %v779
        %v826 = vunpack.c.h.b16 %v779
        %v827 = vunpack.c.l.b16 %v780
        %v828 = vunpack.c.h.b16 %v780
        %v829 = vpack.c.b16 %v797, %v797
        %v830 = vpack.c.b16 %v798, %v798
        %v831 = vpack.c.b16 %v799, %v799
        %v832 = vpack.c.b16 %v800, %v800
        %v833 = vpack.c.b16 %v801, %v801
        %v834 = vpack.c.b16 %v802, %v802
        %v835 = vpack.c.b16 %v803, %v803
        %v836 = vpack.c.b16 %v804, %v804
        %v837 = vpack.c.b16 %v805, %v805
        %v838 = vpack.c.b16 %v806, %v806
        %v839 = vpack.c.b16 %v807, %v807
        %v840 = vpack.c.b16 %v808, %v808
        %v841 = vpack.c.b16 %v809, %v809
        %v842 = vpack.c.b16 %v810, %v810
        %v843 = vpack.c.b16 %v811, %v811
        %v844 = vpack.c.b16 %v812, %v812
        %v845 = vpack.c.b16 %v813, %v813
        %v846 = vpack.c.b16 %v814, %v814
        %v847 = vpack.c.b16 %v815, %v815
        %v848 = vpack.c.b16 %v816, %v816
        %v849 = vpack.c.b16 %v817, %v817
        %v850 = vpack.c.b16 %v818, %v818
        %v851 = vpack.c.b16 %v819, %v819
        %v852 = vpack.c.b16 %v820, %v820
        %v853 = vpack.c.b16 %v821, %v821
        %v854 = vpack.c.b16 %v822, %v822
        %v855 = vpack.c.b16 %v823, %v823
        %v856 = vpack.c.b16 %v824, %v824
        %v857 = vpack.c.b16 %v825, %v825
        %v858 = vpack.c.b16 %v826, %v826
        %v859 = vpack.c.b16 %v827, %v827
        %v860 = vpack.c.b16 %v828, %v828
        %vm893 = vcmask 257024
        %894 = vst.msk [vmem:[%s217] sm:$0xf] %vm893, %v829
        %895 = vst.msk [vmem:[%s217 + $0x4] sm:$0xf] %vm893, %v830
        %896 = vst.msk [vmem:[%s217 + $0x8] sm:$0xf] %vm893, %v831
        %897 = vst.msk [vmem:[%s217 + $0xc] sm:$0xf] %vm893, %v832
        %898 = vst.msk [vmem:[%s217 + $0x10] sm:$0xf] %vm893, %v833
        %899 = vst.msk [vmem:[%s217 + $0x14] sm:$0xf] %vm893, %v834
        %900 = vst.msk [vmem:[%s217 + $0x18] sm:$0xf] %vm893, %v835
        %901 = vst.msk [vmem:[%s217 + $0x1c] sm:$0xf] %vm893, %v836
        %902 = vst.msk [vmem:[%s217 + $0x20] sm:$0xf] %vm893, %v837
        %903 = vst.msk [vmem:[%s217 + $0x24] sm:$0xf] %vm893, %v838
        %904 = vst.msk [vmem:[%s217 + $0x28] sm:$0xf] %vm893, %v839
        %905 = vst.msk [vmem:[%s217 + $0x2c] sm:$0xf] %vm893, %v840
        %906 = vst.msk [vmem:[%s217 + $0x30] sm:$0xf] %vm893, %v841
        %907 = vst.msk [vmem:[%s217 + $0x34] sm:$0xf] %vm893, %v842
        %908 = vst.msk [vmem:[%s217 + $0x38] sm:$0xf] %vm893, %v843
        %909 = vst.msk [vmem:[%s217 + $0x3c] sm:$0xf] %vm893, %v844
        %910 = vst.msk [vmem:[%s217 + $0x40] sm:$0xf] %vm893, %v845
        %911 = vst.msk [vmem:[%s217 + $0x44] sm:$0xf] %vm893, %v846
        %912 = vst.msk [vmem:[%s217 + $0x48] sm:$0xf] %vm893, %v847
        %913 = vst.msk [vmem:[%s217 + $0x4c] sm:$0xf] %vm893, %v848
        %914 = vst.msk [vmem:[%s217 + $0x50] sm:$0xf] %vm893, %v849
        %915 = vst.msk [vmem:[%s217 + $0x54] sm:$0xf] %vm893, %v850
        %916 = vst.msk [vmem:[%s217 + $0x58] sm:$0xf] %vm893, %v851
        %917 = vst.msk [vmem:[%s217 + $0x5c] sm:$0xf] %vm893, %v852
        %918 = vst.msk [vmem:[%s217 + $0x60] sm:$0xf] %vm893, %v853
        %919 = vst.msk [vmem:[%s217 + $0x64] sm:$0xf] %vm893, %v854
        %920 = vst.msk [vmem:[%s217 + $0x68] sm:$0xf] %vm893, %v855
        %921 = vst.msk [vmem:[%s217 + $0x6c] sm:$0xf] %vm893, %v856
        %922 = vst.msk [vmem:[%s217 + $0x70] sm:$0xf] %vm893, %v857
        %923 = vst.msk [vmem:[%s217 + $0x74] sm:$0xf] %vm893, %v858
        %924 = vst.msk [vmem:[%s217 + $0x78] sm:$0xf] %vm893, %v859
        %925 = vst.msk [vmem:[%s217 + $0x7c] sm:$0xf] %vm893, %v860
      $region40: #{tpu_custom_call.1} parent=31 // pred_fallthru
        _
      %s926 = smul.u32 32, %s18
      %p927 = scmp.lt.s32.totalorder %s926, 63
      %s928 = scalar_select %p927, %s926, 63
      %s929 = smul.addr %s928, 4
      %s930 = scalar_lea.vmem %s3, %s929
      // Predicated region
      $region41: #{tpu_custom_call.1} parent=31 // pred_check
        %p931 = pneg %p119
      $region42: #{tpu_custom_call.1} parent=31 // pred_check_branch
        %933 = sbr.rel (%p931) target = $region44
      $region43: #{tpu_custom_call.1} parent=31 // pred_region
        %s934 = smul.u32 32, %s18
      $region44: #{tpu_custom_call.1} parent=31 // pred_fallthru
        _
    $region32: #{tpu_custom_call.1} parent=5 // pred_fallthru
      _
    %p935 = scmp.le.s32.totalorder 2, %s9
    // Predicated region
    $region45: #{tpu_custom_call.1} parent=5 // pred_check
      %p936 = pneg %p935
    $region46: #{tpu_custom_call.1} parent=5 // pred_check_branch
      %938 = sbr.rel (%p936) target = $region48
    $region47: #{tpu_custom_call.1} parent=5 // pred_region
      %s939 = ssub.s32 %s9, 2
      // Predicated region
      $region49: #{tpu_custom_call.1} parent=47 // pred_check
        %p940 = pneg %p125
      $region50: #{tpu_custom_call.1} parent=47 // pred_check_branch
        %942 = sbr.rel (%p940) target = $region52
      $region51: #{tpu_custom_call.1} parent=47 // pred_region
        %s943 = smul.u32 32, %s20
        %p944 = scmp.lt.s32.totalorder %s943, 63
        %s945 = scalar_select %p944, %s943, 63
        %s946 = smul.addr %s945, 4
        %s947 = scalar_lea.vmem %s3, %s946
      $region52: #{tpu_custom_call.1} parent=47 // pred_fallthru
        _
    $region48: #{tpu_custom_call.1} parent=5 // pred_fallthru
      _
  $region6: #{tpu_custom_call.1} parent=0 // loop_footer
    %s13 = sadd.s32 1, %s9
  $region7: #{tpu_custom_call.1} parent=0 // loop_footer_branch
    %8 = sbr.rel target = $region3
  $region8: #{tpu_custom_call.1} parent=0 // loop_exit
    _

</llo_original>
